<compile_context>
chip_gen: v5e
topology: v5e:2x2
jax: 0.10.0
libtpu: 0.0.40
codegen_flags: <defaults>
</compile_context>

<pallas_src>
import functools

import jax
import jax.numpy as jnp
from jax.experimental import pallas as pl
from jax.experimental.pallas import tpu as pltpu


def conv1x1_sub_relu_kernel(wb_ref, x_ref, o_ref):
    # wb_ref: (2, Cout, 1)  -- wb_ref[0] = per-channel scale,
    #                          wb_ref[1] = per-channel bias with the -1 folded in
    # x_ref:  (1, NHW_pad)  -- lane-dense flattened input
    # o_ref:  (Cout, NHW_pad) -- lane-dense output (== transposed conv output)
    x = x_ref[...]                       # (1, NHW_pad)
    w = wb_ref[0]                        # (Cout, 1)
    b = wb_ref[1]                        # (Cout, 1)
    y = x * w + b                        # broadcast -> (Cout, NHW_pad), VPU
    o_ref[...] = jnp.maximum(y, 0.0).astype(o_ref.dtype)


@jax.jit
def model_forward(x, weight, bias):
    """x: (N, 1, H, W); weight: (Cout, 1, 1, 1); bias: (Cout,).
    Returns (Cout, N, H, W) == transpose(relu(conv1x1(x) - 1), 0, 1)."""
    N, Cin, H, W = x.shape
    assert Cin == 1, "this fused kernel assumes Cin == 1"
    Cout = weight.shape[0]
    NHW = N * H * W

    # Lane-align the flattened axis to a multiple of 128 (784 -> 896) so the
    # stores are full-width vst instead of masked vst.msk.
    LANE = 128
    NHW_pad = ((NHW + LANE - 1) // LANE) * LANE

    x_flat = x.reshape(1, NHW).astype(jnp.float32)
    if NHW_pad != NHW:
        x_flat = jnp.pad(x_flat, ((0, 0), (0, NHW_pad - NHW)))

    # Single merged scale/bias operand; fold the "-1" into the bias.
    w_col = weight.reshape(Cout, 1).astype(jnp.float32)
    b_col = (bias.reshape(Cout, 1) - 1.0).astype(jnp.float32)
    wb = jnp.stack([w_col, b_col], axis=0)  # (2, Cout, 1)

    out_flat = pl.pallas_call(
        conv1x1_sub_relu_kernel,
        out_shape=jax.ShapeDtypeStruct((Cout, NHW_pad), jnp.float32),
        in_specs=[
            pl.BlockSpec(memory_space=pltpu.MemorySpace.VMEM),  # wb (2, Cout, 1)
            pl.BlockSpec(memory_space=pltpu.MemorySpace.VMEM),  # x  (1, NHW_pad)
        ],
        out_specs=pl.BlockSpec(memory_space=pltpu.MemorySpace.VMEM),
    )(wb, x_flat)

    # Drop the lane padding, free contiguous reshape back to (Cout, N, H, W)
    # (== torch.transpose(v3, 0, 1).contiguous()).
    out = out_flat[:, :NHW].reshape(Cout, N, H, W)
    return out.astype(x.dtype)


if __name__ == "__main__":
    key = jax.random.PRNGKey(0)
    kx, kw, kb = jax.random.split(key, 3)

    # Input matching the module: (1, 1, 28, 28)
    x = jax.random.normal(kx, (1, 1, 28, 28), dtype=jnp.float32)

    # Deterministic Conv2d(1, 3, kernel_size=1) parameters.
    weight = jax.random.normal(kw, (3, 1, 1, 1), dtype=jnp.float32) * 0.5
    bias = jax.random.normal(kb, (3,), dtype=jnp.float32) * 0.1

    out = jax.block_until_ready(model_forward(x, weight, bias))

    # Pure-JAX reference for correctness.
    conv = x * weight.reshape(1, 3, 1, 1) + bias.reshape(1, 3, 1, 1)  # 1x1 conv, Cin=1
    ref = jnp.transpose(jnp.maximum(conv - 1.0, 0.0), (1, 0, 2, 3))
    assert out.shape == (3, 1, 28, 28), out.shape
    assert jnp.allclose(out, ref, atol=1e-5, rtol=1e-5)

    print("KERNEL_OK")
</pallas_src>

<mosaic_0001>
module attributes {stable_mosaic.version = 11 : i64} {
  func.func @conv1x1_sub_relu_kernel(%arg0: memref<2x3x1xf32, #tpu.memory_space<vmem>>, %arg1: memref<1x896xf32, #tpu.memory_space<vmem>>, %arg2: memref<3x896xf32, #tpu.memory_space<vmem>>) attributes {dimension_semantics = [], scalar_prefetch = 0 : i64, scratch_operands = 0 : i64, tpu.core_type = #tpu.core_type<tc>} {
    %c0 = arith.constant 0 : index
    %c0_0 = arith.constant 0 : index
    %0 = vector.load %arg1[%c0, %c0_0] : memref<1x896xf32, #tpu.memory_space<vmem>>, vector<1x896xf32>
    %c0_1 = arith.constant 0 : index
    %c0_2 = arith.constant 0 : index
    %c0_3 = arith.constant 0 : index
    %1 = vector.load %arg0[%c0_1, %c0_2, %c0_3] : memref<2x3x1xf32, #tpu.memory_space<vmem>>, vector<1x3x1xf32>
    %2 = vector.shape_cast %1 : vector<1x3x1xf32> to vector<3x1xf32>
    %c1 = arith.constant 1 : index
    %c0_4 = arith.constant 0 : index
    %c0_5 = arith.constant 0 : index
    %3 = vector.load %arg0[%c1, %c0_4, %c0_5] : memref<2x3x1xf32, #tpu.memory_space<vmem>>, vector<1x3x1xf32>
    %4 = vector.shape_cast %3 : vector<1x3x1xf32> to vector<3x1xf32>
    %5 = vector.broadcast %0 : vector<1x896xf32> to vector<3x896xf32>
    %6 = vector.broadcast %2 : vector<3x1xf32> to vector<3x896xf32>
    %7 = arith.mulf %5, %6 : vector<3x896xf32>
    %8 = vector.broadcast %4 : vector<3x1xf32> to vector<3x896xf32>
    %9 = arith.addf %7, %8 : vector<3x896xf32>
    %cst = arith.constant 0.000000e+00 : f32
    %10 = vector.broadcast %cst : f32 to vector<3x896xf32>
    %11 = arith.maximumf %9, %10 : vector<3x896xf32>
    %c0_6 = arith.constant 0 : index
    %c0_7 = arith.constant 0 : index
    %12 = vector.load %arg2[%c0_6, %c0_7] : memref<3x896xf32, #tpu.memory_space<vmem>>, vector<3x896xf32>
    tpu.vector_store %arg2[%c0_6, %c0_7], %11 {strides = array<i32>} : memref<3x896xf32, #tpu.memory_space<vmem>>, vector<3x896xf32>,
    return
  }
}

</mosaic_0001>

<llo_original>
// kernel: model_forward.1
$region0: #{model_forward.1}
  #allocation0 [shape = 'u32[]', space=smem, size = 0x4, offset = 0x4, fixed_abs, tag = 'smem constant byte address 0x4 - core index']
  #allocation1 [shape = 'u32[72,128]{1,0:T(1,128)}', space=vmem, size = 0x9000, scoped, tag = 'internal scratch']
  %s0 = inlined_call_operand.vmem [shape: f32[2,3,1], index: 0, kind: input, shape index: {}]
  %s1 = inlined_call_operand.vmem [shape: f32[1,896], index: 1, kind: input, shape index: {}]
  %s2 = inlined_call_operand.vmem [shape: f32[3,896], index: 2, kind: output, shape index: {}]
  %s3 = sld [smem:[#allocation0]]
  $region18: #{model_forward.1} parent=0
    _
  %s5 = ssub.s32 1, %s3
  %s6 = scalar_select 0, %s5, %s3
  // Predicated region
  $region2: #{model_forward.1} parent=0 // pred_check
    _
  $region3: #{model_forward.1} parent=0 // pred_check_branch
    %8 = sbr.rel (0) target = $region5
  $region4: #{model_forward.1} parent=0 // pred_region
    _
  $region5: #{model_forward.1} parent=0 // pred_fallthru
    _
  // Predicated region
  $region6: #{model_forward.1} parent=0 // pred_check
    _
  $region7: #{model_forward.1} parent=0 // pred_check_branch
    %10 = sbr.rel (0) target = $region9
  $region8: #{model_forward.1} parent=0 // pred_region
    _
  $region9: #{model_forward.1} parent=0 // pred_fallthru
    _
  %v11 = vld [vmem:[%s1] sm:$0xff]
  %v12 = vld [vmem:[%s0] sm:$0x7]
  %s13 = scalar_lea.vmem %s0, 4
  %v14 = vld [vmem:[%s13] sm:$0x7]
  %v16 = vperm.slane %v11, 0
  %v17 = vperm.slane %v11, 1
  %v18 = vperm.slane %v11, 2
  %v19 = vperm.slane %v11, 3
  %v20 = vperm.slane %v11, 4
  %v21 = vperm.slane %v11, 5
  %v22 = vperm.slane %v11, 6
  %31 = vset.pattern.permute.xlu0 0
  %32 = vperm.xlu0 %31, %v12
  %v33 = vpop.permute.xlu0 %32
  %v35 = vmul.f32 %v16, %v33
  %v36 = vmul.f32 %v17, %v33
  %v37 = vmul.f32 %v18, %v33
  %v38 = vmul.f32 %v19, %v33
  %v39 = vmul.f32 %v20, %v33
  %v40 = vmul.f32 %v21, %v33
  %v41 = vmul.f32 %v22, %v33
  %43 = vset.pattern.permute.xlu0 0
  %44 = vperm.xlu0 %43, %v14
  %v45 = vpop.permute.xlu0 %44
  %v47 = vadd.f32 %v35, %v45
  %v48 = vadd.f32 %v36, %v45
  %v49 = vadd.f32 %v37, %v45
  %v50 = vadd.f32 %v38, %v45
  %v51 = vadd.f32 %v39, %v45
  %v52 = vadd.f32 %v40, %v45
  %v53 = vadd.f32 %v41, %v45
  %v54 = vmax.f32 %v47, 0.0
  %v55 = vmax.f32 %v48, 0.0
  %v56 = vmax.f32 %v49, 0.0
  %v57 = vmax.f32 %v50, 0.0
  %v58 = vmax.f32 %v51, 0.0
  %v59 = vmax.f32 %v52, 0.0
  %v60 = vmax.f32 %v53, 0.0
  %v67 = vrot.slane %v55, 4
  %v68 = vrot.slane %v57, 4
  %v69 = vrot.slane %v59, 4
  %vm70 = vcmask 1043456
  %v71 = vsel %vm70, %v54, %v67
  %v72 = vsel %vm70, %v56, %v68
  %v73 = vsel %vm70, %v58, %v69
  %77 = vst [vmem:[%s2] sm:$0x77] %v71
  %78 = vst [vmem:[%s2 + $0x8] sm:$0x77] %v72
  %79 = vst [vmem:[%s2 + $0x10] sm:$0x77] %v73
  %80 = vst [vmem:[%s2 + $0x18] sm:$0x7] %v60
  // Predicated region
  $region10: #{model_forward.1} parent=0 // pred_check
    _
  $region11: #{model_forward.1} parent=0 // pred_check_branch
    %82 = sbr.rel (0) target = $region13
  $region12: #{model_forward.1} parent=0 // pred_region
    _
  $region13: #{model_forward.1} parent=0 // pred_fallthru
    _
  // Predicated region
  $region14: #{model_forward.1} parent=0 // pred_check
    _
  $region15: #{model_forward.1} parent=0 // pred_check_branch
    %84 = sbr.rel (0) target = $region17
  $region16: #{model_forward.1} parent=0 // pred_region
    _
  $region17: #{model_forward.1} parent=0 // pred_fallthru
    _

</llo_original>
